<compile_context>
chip_gen: v6e
topology: v6e:2x2x1
jax: 0.10.0
libtpu: 0.0.40
codegen_flags: <defaults>
</compile_context>

<pallas_src>
import functools

import jax
import jax.numpy as jnp
from jax.experimental import pallas as pl
from jax.experimental.pallas import tpu as pltpu


def _round_up(x: int, m: int) -> int:
    return ((x + m - 1) // m) * m


def _default_vmem_budget() -> int:
    """~82% of physical VMEM (=> ~105 MiB on 128 MiB v5e/v6e, ~52 MiB on 64 MiB v7x),
    leaving headroom for compiler-internal scratch and double-buffering."""
    cap = 128 * 1024 * 1024
    try:
        cap = int(getattr(pltpu.get_tpu_info(), "vmem_capacity_bytes", cap))
    except Exception:
        pass
    return int(cap * 0.82)


def _halvings(start: int, floor: int):
    vals, v = [], max(start, floor)
    while True:
        vals.append(v)
        if v <= floor:
            break
        v = max(floor, _round_up(v // 2, 8))
    return vals


def _select_tiles(d_model_p, d_ff_p, wsz, tm_req, budget, tf_force=None):
    """Pick (tm_max, tf).  Prefers fully VMEM-resident weights (single reduction
    step); otherwise the largest 128-aligned divisor chunk of d_ff_p and the
    largest row tile that fit the VMEM budget."""
    xsz = 4  # activations / output / accumulator budgeted at f32 (worst case)

    def fits(tm, tf, multi_k):
        fp = (2 * tm * d_model_p * xsz              # x tile (double-buffered)
              + 2 * d_model_p * (2 * tf) * wsz      # fused W1||Wv chunk
              + 2 * tf * d_model_p * wsz            # W2 chunk
              + 2 * tm * d_model_p * xsz            # out tile
              + (tm * d_model_p * 4 if multi_k else 0))  # f32 accumulator
        return fp <= budget

    tm0 = max(8, _round_up(tm_req, 8))

    if tf_force is not None:
        multi = tf_force < d_ff_p
        for tm_c in _halvings(tm0, 128):
            if fits(tm_c, tf_force, multi):
                return tm_c, tf_force
        return 128, tf_force

    # 1) weights fully resident: reduction grid collapses to one step, weights are
    #    streamed from HBM exactly once total.
    for tm_c in _halvings(tm0, 128):
        if fits(tm_c, d_ff_p, False):
            return tm_c, d_ff_p

    # 2) stream d_ff: largest 128-multiple divisor of d_ff_p that fits.
    q = d_ff_p // 128
    tf_cands = sorted((128 * d for d in range(1, q + 1) if q % d == 0), reverse=True)
    for tm_c in _halvings(tm0, 128):
        for tf in tf_cands:
            if fits(tm_c, tf, True):
                return tm_c, tf
    return 128, 128  # last resort; compiler will complain if it truly can't fit


def prepare_swiglu_params(w1, wv, w2, *, tm=768, tf=None, weight_dtype=None,
                          vmem_budget_bytes=None):
    """One-time weight preparation: pad to 128-aligned lane-dense tiles, fuse
    W1||Wv chunk-interleaved, and pick tile sizes.  Do NOT call per forward pass."""
    d_model, d_ff = w1.shape
    assert wv.shape == (d_model, d_ff) and w2.shape == (d_ff, d_model)
    if weight_dtype is not None:
        w1, wv, w2 = (a.astype(weight_dtype) for a in (w1, wv, w2))

    d_model_p = _round_up(d_model, 128)   # lane-dense output / contraction dim
    d_ff_p = _round_up(d_ff, 128)         # padded to 128 only (not to tf)

    budget = _default_vmem_budget() if vmem_budget_bytes is None else int(vmem_budget_bytes)
    wsz = jnp.dtype(w1.dtype).itemsize

    if tf is not None:                    # explicit override (testing / tuning)
        tf = min(_round_up(tf, 128), d_ff_p)
        while d_ff_p % tf:
            tf -= 128
    tm_max, tf = _select_tiles(d_model_p, d_ff_p, wsz, tm, budget, tf_force=tf)

    pad_dm, pad_ff = d_model_p - d_model, d_ff_p - d_ff
    w1_p = jnp.pad(w1, ((0, pad_dm), (0, pad_ff))) if (pad_dm or pad_ff) else w1
    wv_p = jnp.pad(wv, ((0, pad_dm), (0, pad_ff))) if (pad_dm or pad_ff) else wv
    w2_p = jnp.pad(w2, ((0, pad_ff), (0, pad_dm))) if (pad_dm or pad_ff) else w2

    # Fuse gate + value projections, interleaved per tf-chunk so reduction step k
    # fetches one (d_model_p, 2*tf) block laid out as [W1_k | Wv_k].
    n_k = d_ff_p // tf
    w12 = jnp.concatenate(
        [w1_p.reshape(d_model_p, n_k, tf), wv_p.reshape(d_model_p, n_k, tf)], axis=2
    ).reshape(d_model_p, 2 * d_ff_p)

    return dict(w12=w12, w2=w2_p, d_model=d_model, d_ff=d_ff, tf=int(tf),
                tm_max=int(tm_max), vmem_limit=int(budget))


# ----------------------------- kernels ---------------------------------------

def _silu_gated_partial(x_ref, w12_ref, w2_ref):
    """(SiLU(x @ W1_chunk) * (x @ Wv_chunk)) @ W2_chunk with f32 accumulation."""
    tf = w2_ref.shape[0]
    x = x_ref[...]
    h12 = jnp.dot(x, w12_ref[...], preferred_element_type=jnp.float32)
    g = h12[:, :tf]
    v = h12[:, tf:]
    g = g * jax.nn.sigmoid(g)                  # SiLU on the f32 MXU output (EUP)
    h = (g * v).astype(w2_ref.dtype)           # MXU-native dtype for the 3rd matmul
    # TODO(synk): dropout (p=0.1) on h is training-only; inference path is identity.
    return jnp.dot(h, w2_ref[...], preferred_element_type=jnp.float32)


def _swiglu_kernel_resident(x_ref, w12_ref, w2_ref, o_ref):
    # Whole d_ff resident in VMEM: one step per row tile, no accumulator.
    o_ref[...] = _silu_gated_partial(x_ref, w12_ref, w2_ref).astype(o_ref.dtype)


def _swiglu_kernel_stream_f32out(x_ref, w12_ref, w2_ref, o_ref):
    # d_ff streamed; accumulate straight into the f32 output block (no scratch).
    @pl.when(pl.program_id(1) == 0)
    def _():
        o_ref[...] = jnp.zeros_like(o_ref)

    o_ref[...] += _silu_gated_partial(x_ref, w12_ref, w2_ref)


def _swiglu_kernel_stream(x_ref, w12_ref, w2_ref, o_ref, acc_ref):
    # d_ff streamed; f32 scratch accumulator, cast out on the last step.
    k = pl.program_id(1)

    @pl.when(k == 0)
    def _():
        acc_ref[...] = jnp.zeros_like(acc_ref)

    acc_ref[...] += _silu_gated_partial(x_ref, w12_ref, w2_ref)

    @pl.when(k == pl.num_programs(1) - 1)
    def _():
        o_ref[...] = acc_ref[...].astype(o_ref.dtype)


# ----------------------------- host wrapper ----------------------------------

@functools.partial(jax.jit,
                   static_argnames=("d_model", "d_ff", "tf", "tm_max", "vmem_limit"))
def _swiglu_apply(x, w12, w2p, *, d_model, d_ff, tf, tm_max, vmem_limit):
    B, S, dm_in = x.shape
    assert dm_in == d_model
    d_ff_p, d_model_p = w2p.shape
    out_dtype = x.dtype
    M = B * S

    # Row tile: as large as the (prepare-time validated) budget allows, but with at
    # least 2 tiles on the "parallel" axis so both v7x TensorCores get work.
    tm = max(8, _round_up(min(tm_max, _round_up(M, 8)), 8))
    if _round_up(M, tm) // tm < 2 and _round_up(M, 8) >= 16:
        tm = max(8, _round_up((M + 1) // 2, 8))
    M_p = _round_up(M, tm)
    n_rows = M_p // tm
    n_k = d_ff_p // tf

    x_flat = x.reshape(M, d_model)
    if (M_p, d_model_p) != (M, d_model):
        x_flat = jnp.pad(x_flat, ((0, M_p - M), (0, d_model_p - d_model)))
    x_flat = x_flat.astype(w12.dtype)          # run the MXU in the weights' dtype

    io_bytes = 2 * M * d_model * jnp.dtype(out_dtype).itemsize
    w_bytes = (w12.size + w2p.size) * jnp.dtype(w12.dtype).itemsize
    cost = pl.CostEstimate(
        flops=6 * M * d_model * d_ff,          # 3 matmuls: 2*M*dm*dff each
        transcendentals=M * d_ff,              # sigmoid
        bytes_accessed=io_bytes + w_bytes * (1 if n_k == 1 else n_rows),
    )

    if n_k == 1:
        # Weights fully VMEM-resident: constant block index -> DMA'd exactly once.
        grid_spec = pltpu.PrefetchScalarGridSpec(
            num_scalar_prefetch=0,
            grid=(n_rows,),
            in_specs=[
                pl.BlockSpec((tm, d_model_p), lambda i: (i, 0)),
                pl.BlockSpec((d_model_p, 2 * d_ff_p), lambda i: (0, 0)),
                pl.BlockSpec((d_ff_p, d_model_p), lambda i: (0, 0)),
            ],
            out_specs=pl.BlockSpec((tm, d_model_p), lambda i: (i, 0)),
        )
        kernel = _swiglu_kernel_resident
        semantics = ("parallel",)
    else:
        if out_dtype == jnp.float32:
            kernel, scratch = _swiglu_kernel_stream_f32out, []
        else:
            kernel = _swiglu_kernel_stream
            scratch = [pltpu.VMEM((tm, d_model_p), jnp.float32)]
        grid_spec = pltpu.PrefetchScalarGridSpec(
            num_scalar_prefetch=0,
            grid=(n_rows, n_k),                # reduction axis last
            in_specs=[
                pl.BlockSpec((tm, d_model_p), lambda i, k: (i, 0)),
                pl.BlockSpec((d_model_p, 2 * tf), lambda i, k: (0, k)),
                pl.BlockSpec((tf, d_model_p), lambda i, k: (k, 0)),
            ],
            out_specs=pl.BlockSpec((tm, d_model_p), lambda i, k: (i, 0)),
            scratch_shapes=scratch,
        )
        semantics = ("parallel", "arbitrary")

    out_flat = pl.pallas_call(
        kernel,
        out_shape=jax.ShapeDtypeStruct((M_p, d_model_p), out_dtype),
        grid_spec=grid_spec,
        compiler_params=pltpu.CompilerParams(
            dimension_semantics=semantics,
            vmem_limit_bytes=vmem_limit,
        ),
        cost_estimate=cost,
    )(x_flat, w12, w2p)

    return out_flat[:M, :d_model].reshape(B, S, d_model)


def swiglu_apply(x, params):
    return _swiglu_apply(x, params["w12"], params["w2"],
                         d_model=params["d_model"], d_ff=params["d_ff"],
                         tf=params["tf"], tm_max=params["tm_max"],
                         vmem_limit=params["vmem_limit"])


def swiglu(x, w1, wv, w2, **prepare_kwargs):
    """One-shot convenience (re-prepares weights each call); prefer
    prepare_swiglu_params + swiglu_apply when weights are reused."""
    return swiglu_apply(x, prepare_swiglu_params(w1, wv, w2, **prepare_kwargs))


# ----------------------------- reference & demo -------------------------------

def init_params(key, d_model, d_ff, dtype=jnp.float32):
    # Deterministic init mimicking nn.Linear's uniform(-1/sqrt(fan_in), 1/sqrt(fan_in)).
    k1, k2, k3 = jax.random.split(key, 3)
    b1 = 1.0 / jnp.sqrt(d_model)
    b2 = 1.0 / jnp.sqrt(d_ff)
    # stored as [in, out] (transpose of PyTorch's [out, in] weight layout)
    w1 = jax.random.uniform(k1, (d_model, d_ff), dtype, minval=-b1, maxval=b1)
    wv = jax.random.uniform(k2, (d_model, d_ff), dtype, minval=-b1, maxval=b1)
    w2 = jax.random.uniform(k3, (d_ff, d_model), dtype, minval=-b2, maxval=b2)
    return w1, wv, w2


def swiglu_ref(x, w1, wv, w2):
    h1 = x @ w1
    g = h1 * jax.nn.sigmoid(h1)
    v = x @ wv
    return (g * v) @ w2


if __name__ == "__main__":
    key = jax.random.PRNGKey(0)
    kx, kp = jax.random.split(key)

    # 1) Small shape: weights fully VMEM-resident (single reduction step).
    B, S, d_model, d_ff = 2, 8, 32, 64
    x = jax.random.normal(kx, (B, S, d_model), jnp.float32)
    w1, wv, w2 = init_params(kp, d_model, d_ff)
    params = prepare_swiglu_params(w1, wv, w2)
    out = jax.block_until_ready(swiglu_apply(x, params))
    ref = swiglu_ref(x, w1, wv, w2)
    assert out.shape == (B, S, d_model)
    assert jnp.allclose(out, ref, atol=1e-5, rtol=1e-5)

    # 2) Ragged shape, forced d_ff streaming (multi-k, f32 in-place accumulation).
    B2, S2, dm2, dff2 = 3, 47, 96, 320
    x2 = jax.random.normal(kx, (B2, S2, dm2), jnp.float32)
    w1b, wvb, w2b = init_params(kp, dm2, dff2)
    params2 = prepare_swiglu_params(w1b, wvb, w2b, tm=128, tf=128)
    out2 = jax.block_until_ready(swiglu_apply(x2, params2))
    ref2 = swiglu_ref(x2, w1b, wvb, w2b)
    assert jnp.allclose(out2, ref2, atol=1e-4, rtol=1e-4)

    # 3) bf16 weights/activations, streamed reduction with f32 scratch accumulator.
    B3, S3, dm3, dff3 = 2, 16, 64, 256
    x3 = jax.random.normal(kx, (B3, S3, dm3), jnp.float32).astype(jnp.bfloat16)
    w1c, wvc, w2c = init_params(kp, dm3, dff3)
    params3 = prepare_swiglu_params(w1c, wvc, w2c, tf=128, weight_dtype=jnp.bfloat16)
    out3 = jax.block_until_ready(swiglu_apply(x3, params3))
    ref3 = swiglu_ref(x3.astype(jnp.float32),
                      w1c.astype(jnp.bfloat16).astype(jnp.float32),
                      wvc.astype(jnp.bfloat16).astype(jnp.float32),
                      w2c.astype(jnp.bfloat16).astype(jnp.float32))
    assert out3.shape == (B3, S3, dm3)
    assert jnp.allclose(out3.astype(jnp.float32), ref3, atol=3e-2, rtol=3e-2)

    print("KERNEL_OK")
</pallas_src>

<mosaic_0001>
module attributes {stable_mosaic.version = 11 : i64} {
  func.func @_swiglu_kernel_resident(%arg0: i32, %arg1: memref<8x128xf32, #tpu.memory_space<vmem>>, %arg2: memref<128x256xf32, #tpu.memory_space<vmem>>, %arg3: memref<128x128xf32, #tpu.memory_space<vmem>>, %arg4: memref<8x128xf32, #tpu.memory_space<vmem>>) attributes {dimension_semantics = [#tpu.dimension_semantics<parallel>], iteration_bounds = array<i64: 2>, scalar_prefetch = 0 : i64, scratch_operands = 0 : i64, tpu.core_type = #tpu.core_type<tc>, window_params = [{transform_indices = @transform_0, window_bounds = array<i64: 8, 128>}, {pipeline_mode = #tpu.pipeline_mode<synchronous>, transform_indices = @transform_1, window_bounds = array<i64: 128, 256>}, {pipeline_mode = #tpu.pipeline_mode<synchronous>, transform_indices = @transform_2, window_bounds = array<i64: 128, 128>}, {transform_indices = @transform_3, window_bounds = array<i64: 8, 128>}]} {
    %c0 = arith.constant 0 : index
    %c0_0 = arith.constant 0 : index
    %0 = vector.load %arg1[%c0, %c0_0] : memref<8x128xf32, #tpu.memory_space<vmem>>, vector<8x128xf32>
    %c0_1 = arith.constant 0 : index
    %c0_2 = arith.constant 0 : index
    %1 = vector.load %arg2[%c0_1, %c0_2] : memref<128x256xf32, #tpu.memory_space<vmem>>, vector<128x256xf32>
    %cst = arith.constant dense<0.000000e+00> : vector<8x256xf32>
    %2 = tpu.matmul %0, %1, %cst {dimension_numbers = #tpu.dot_dimension_numbers<[1], [0], [0], [1], [0, 0, 1, 1], [], []>} : vector<8x128xf32>, vector<128x256xf32>, vector<8x256xf32> -> vector<8x256xf32>
    %3 = vector.extract_strided_slice %2 {offsets = [0, 0], sizes = [8, 128], strides = [1, 1]} : vector<8x256xf32> to vector<8x128xf32>
    %4 = vector.extract_strided_slice %2 {offsets = [0, 128], sizes = [8, 128], strides = [1, 1]} : vector<8x256xf32> to vector<8x128xf32>
    %5 = arith.negf %3 : vector<8x128xf32>
    %6 = math.exp %5 : vector<8x128xf32>
    %cst_3 = arith.constant 1.000000e+00 : f32
    %7 = vector.broadcast %cst_3 : f32 to vector<8x128xf32>
    %8 = arith.addf %7, %6 : vector<8x128xf32>
    %9 = arith.divf %7, %8 : vector<8x128xf32>
    %10 = arith.mulf %3, %9 : vector<8x128xf32>
    %11 = arith.mulf %10, %4 : vector<8x128xf32>
    %c0_4 = arith.constant 0 : index
    %c0_5 = arith.constant 0 : index
    %12 = vector.load %arg3[%c0_4, %c0_5] : memref<128x128xf32, #tpu.memory_space<vmem>>, vector<128x128xf32>
    %cst_6 = arith.constant dense<0.000000e+00> : vector<8x128xf32>
    %13 = tpu.matmul %11, %12, %cst_6 {dimension_numbers = #tpu.dot_dimension_numbers<[1], [0], [0], [1], [0, 0, 1, 1], [], []>} : vector<8x128xf32>, vector<128x128xf32>, vector<8x128xf32> -> vector<8x128xf32>
    %c0_7 = arith.constant 0 : index
    %c0_8 = arith.constant 0 : index
    %14 = vector.load %arg4[%c0_7, %c0_8] : memref<8x128xf32, #tpu.memory_space<vmem>>, vector<8x128xf32>
    tpu.vector_store %arg4[%c0_7, %c0_8], %13 {strides = array<i32>} : memref<8x128xf32, #tpu.memory_space<vmem>>, vector<8x128xf32>,
    return
  }
  func.func @transform_0(%arg0: i32) -> (i32, i32) {
    %c0_i32 = arith.constant 0 : i32
    %c0_i32_0 = arith.constant 0 : i32
    return %arg0, %c0_i32 : i32, i32
  }
  func.func @transform_1(%arg0: i32) -> (i32, i32) {
    %c0_i32 = arith.constant 0 : i32
    %c0_i32_0 = arith.constant 0 : i32
    %c0_i32_1 = arith.constant 0 : i32
    return %c0_i32, %c0_i32_0 : i32, i32
  }
  func.func @transform_2(%arg0: i32) -> (i32, i32) {
    %c0_i32 = arith.constant 0 : i32
    %c0_i32_0 = arith.constant 0 : i32
    %c0_i32_1 = arith.constant 0 : i32
    return %c0_i32, %c0_i32_0 : i32, i32
  }
  func.func @transform_3(%arg0: i32) -> (i32, i32) {
    %c0_i32 = arith.constant 0 : i32
    %c0_i32_0 = arith.constant 0 : i32
    return %arg0, %c0_i32 : i32, i32
  }
}

</mosaic_0001>

<llo_original>
// kernel: _swiglu_apply.1
$region0: #{_swiglu_apply.1}
  #allocation0 [shape = 'u32[]', space=smem, size = 0x4, offset = 0x4, fixed_abs, tag = 'smem constant byte address 0x4 - core index']
  #allocation1 [shape = 'u32[144,128]{1,0:T(1,128)}', space=vmem, size = 0x12000, scoped, tag = 'internal scratch']
  %s0 = inlined_call_operand.vmem [shape: f32[16,128], index: 0, kind: input, shape index: {}]
  %s1 = inlined_call_operand.hbm [shape: f32[128,256], index: 1, kind: input, shape index: {}]
  %s2 = inlined_call_operand.hbm [shape: f32[128,128], index: 2, kind: input, shape index: {}]
  %s3 = inlined_call_operand.vmem [shape: f32[16,128], index: 3, kind: output, shape index: {}]
  %s4 = sld [smem:[#allocation0]]
  $region53: #{_swiglu_apply.1} parent=0
    _
  %s6 = ssub.s32 1, %s4
  %s7 = scalar_select 0, %s6, %s4
  $region1: #{_swiglu_apply.1} parent=0
    #allocation2 [shape = 'u8[131072]{0}', space=vmem, size = 0x20000, scoped, tag = 'input window, operand 1, single buffered']
    #allocation3 [shape = 's32[2]{0}', space=sflag, size = 0x8, scoped, tag = 'scoped memory for _swiglu_apply.1']
    #allocation4 [shape = 'u8[65536]{0}', space=vmem, size = 0x10000, scoped, tag = 'input window, operand 2, single buffered']
    #allocation5 [shape = 's32[1]{0}', space=sflag, size = 0x4, scoped, tag = 'scoped memory for _swiglu_apply.1']
    %8 = vsyncpa [#allocation3], 0
    %9 = vsyncpa [#allocation5], 0
    loop: start=0, step=1, limit=4
    $region2: #{_swiglu_apply.1} parent=1 // loop_pre_header
      _
    $region3: #{_swiglu_apply.1} parent=1 // loop_header
      %s11 = sphi 0, %s15
      %p12 = scmp.ge.s32.totalorder %s11, 4
      %s21 = sphi 0, %s23
      %s24 = sphi 0, %s21
      %s25 = sphi 0, %s24
      %s41 = sphi 0, %s25
      %s45 = sphi 0, %s45
      %s47 = sphi 0, %s45
      %s48 = sphi 0, %s47
      %s62 = sphi 0, %s48
      %s66 = sphi 0, %s66
      %s68 = sphi 0, %s66
      %s69 = sphi 0, %s68
      %s83 = sphi 0, %s69
      %s89 = sphi 0, %s91
      %s92 = sphi 0, %s89
      %s93 = sphi 0, %s92
      %s109 = sphi 0, %s93
    $region4: #{_swiglu_apply.1} parent=1 // loop_header_branch
      %14 = sbr.rel (%p12) target = $region8
    $region5: #{_swiglu_apply.1} parent=1 // loop_body
      %s16 = ssub.s32 %s11, 1
      %s17 = ssub.s32 %s11, 2
      %s18 = sadd.s32 %s11, 1
      %s19 = ssub.s32 %s11, %s18
      %p20 = scmp.eq.s32.totalorder %s19, 0
      %s22 = sadd.s32 %s21, 1
      %s23 = scalar_select %p20, %s21, %s22
      %p26 = pneg %p20
      %p27 = scmp.eq.s32.totalorder %s11, 1
      %p28 = por %p26, %p27
      %p29 = scmp.ne.s32.totalorder %s21, %s24
      %p30 = scmp.eq.s32.totalorder %s11, 0
      %p31 = por %p29, %p30
      %p32 = scmp.ne.s32.totalorder %s21, %s24
      %p33 = scmp.eq.s32.totalorder %s16, 1
      %p34 = por %p32, %p33
      %p35 = scmp.ne.s32.totalorder %s24, %s25
      %p36 = scmp.eq.s32.totalorder %s16, 0
      %p37 = por %p35, %p36
      %p38 = scmp.ne.s32.totalorder %s24, %s25
      %p39 = scmp.eq.s32.totalorder %s17, 1
      %p40 = por %p38, %p39
      %p42 = scmp.ne.s32.totalorder %s25, %s41
      %p43 = scmp.eq.s32.totalorder %s17, 0
      %p44 = por %p42, %p43
      %s46 = sadd.s32 %s45, 1
      %p49 = scmp.eq.s32.totalorder %s11, 1
      %p50 = scmp.ne.s32.totalorder %s45, %s47
      %p51 = scmp.eq.s32.totalorder %s11, 0
      %p52 = por %p50, %p51
      %p53 = scmp.ne.s32.totalorder %s45, %s47
      %p54 = scmp.eq.s32.totalorder %s16, 1
      %p55 = por %p53, %p54
      %p56 = scmp.ne.s32.totalorder %s47, %s48
      %p57 = scmp.eq.s32.totalorder %s16, 0
      %p58 = por %p56, %p57
      %p59 = scmp.ne.s32.totalorder %s47, %s48
      %p60 = scmp.eq.s32.totalorder %s17, 1
      %p61 = por %p59, %p60
      %p63 = scmp.ne.s32.totalorder %s48, %s62
      %p64 = scmp.eq.s32.totalorder %s17, 0
      %p65 = por %p63, %p64
      %s67 = sadd.s32 %s66, 1
      %p70 = scmp.eq.s32.totalorder %s11, 1
      %p71 = scmp.ne.s32.totalorder %s66, %s68
      %p72 = scmp.eq.s32.totalorder %s11, 0
      %p73 = por %p71, %p72
      %p74 = scmp.ne.s32.totalorder %s66, %s68
      %p75 = scmp.eq.s32.totalorder %s16, 1
      %p76 = por %p74, %p75
      %p77 = scmp.ne.s32.totalorder %s68, %s69
      %p78 = scmp.eq.s32.totalorder %s16, 0
      %p79 = por %p77, %p78
      %p80 = scmp.ne.s32.totalorder %s68, %s69
      %p81 = scmp.eq.s32.totalorder %s17, 1
      %p82 = por %p80, %p81
      %p84 = scmp.ne.s32.totalorder %s69, %s83
      %p85 = scmp.eq.s32.totalorder %s17, 0
      %p86 = por %p84, %p85
      %s87 = ssub.s32 %s11, %s18
      %p88 = scmp.eq.s32.totalorder %s87, 0
      %s90 = sadd.s32 %s89, 1
      %s91 = scalar_select %p88, %s89, %s90
      %p94 = pneg %p88
      %p95 = scmp.eq.s32.totalorder %s11, 1
      %p96 = por %p94, %p95
      %p97 = scmp.ne.s32.totalorder %s89, %s92
      %p98 = scmp.eq.s32.totalorder %s11, 0
      %p99 = por %p97, %p98
      %p100 = scmp.ne.s32.totalorder %s89, %s92
      %p101 = scmp.eq.s32.totalorder %s16, 1
      %p102 = por %p100, %p101
      %p103 = scmp.ne.s32.totalorder %s92, %s93
      %p104 = scmp.eq.s32.totalorder %s16, 0
      %p105 = por %p103, %p104
      %p106 = scmp.ne.s32.totalorder %s92, %s93
      %p107 = scmp.eq.s32.totalorder %s17, 1
      %p108 = por %p106, %p107
      %p110 = scmp.ne.s32.totalorder %s93, %s109
      %p111 = scmp.eq.s32.totalorder %s17, 0
      %p112 = por %p110, %p111
      %p113 = scmp.le.s32.totalorder 1, %s11
      %p114 = scmp.lt.s32.totalorder %s11, 3
      %p115 = pnand %p113, %p114
      %p116 = pneg %p115
      // Predicated region
      $region9: #{_swiglu_apply.1} parent=5 // pred_check
        _
      $region10: #{_swiglu_apply.1} parent=5 // pred_check_branch
        %118 = sbr.rel (%p115) target = $region12
      $region11: #{_swiglu_apply.1} parent=5 // pred_region
        %s119 = ssub.s32 %s11, 1
        // Predicated region
        $region13: #{_swiglu_apply.1} parent=11 // pred_check
          %p120 = pneg %p58
        $region14: #{_swiglu_apply.1} parent=11 // pred_check_branch
          %122 = sbr.rel (%p120) target = $region16
        $region15: #{_swiglu_apply.1} parent=11 // pred_region
          %s124 = ssub.s32 4096, 4096
          %125 = vsyncadd [#allocation3], %s124
          %s126 = sshll.u32 [#allocation2], 4
          %s127 = int_to_ptr.vmem [resolvable:$true] %s126
          %132 = dma.hbm_to_vmem [thread:$0]  %s1, 4096, %s127, [#allocation3], 256, 256, 16
        $region16: #{_swiglu_apply.1} parent=11 // pred_fallthru
          _
        // Predicated region
        $region17: #{_swiglu_apply.1} parent=11 // pred_check
          %p133 = pneg %p79
        $region18: #{_swiglu_apply.1} parent=11 // pred_check_branch
          %135 = sbr.rel (%p133) target = $region20
        $region19: #{_swiglu_apply.1} parent=11 // pred_region
          %s137 = ssub.s32 2048, 2048
          %138 = vsyncadd [#allocation5], %s137
          %s139 = sshll.u32 [#allocation4], 4
          %s140 = int_to_ptr.vmem [resolvable:$true] %s139
          %145 = dma.hbm_to_vmem [thread:$0]  %s2, 2048, %s140, [#allocation5], 128, 128, 8
        $region20: #{_swiglu_apply.1} parent=11 // pred_fallthru
          _
      $region12: #{_swiglu_apply.1} parent=5 // pred_fallthru
        _
      %p146 = scmp.lt.s32.totalorder %s11, 2
      // Predicated region
      $region21: #{_swiglu_apply.1} parent=5 // pred_check
        %p147 = pneg %p146
      $region22: #{_swiglu_apply.1} parent=5 // pred_check_branch
        %149 = sbr.rel (%p147) target = $region24
      $region23: #{_swiglu_apply.1} parent=5 // pred_region
        // Predicated region
        $region25: #{_swiglu_apply.1} parent=23 // pred_check
          %p150 = pneg %p31
        $region26: #{_swiglu_apply.1} parent=23 // pred_check_branch
          %152 = sbr.rel (%p150) target = $region28
        $region27: #{_swiglu_apply.1} parent=23 // pred_region
          %p153 = scmp.lt.s32.totalorder %s11, 1
          %s154 = scalar_select %p153, %s11, 1
          %s155 = smul.addr %s154, 8
          %s156 = scalar_lea.vmem %s0, %s155
        $region28: #{_swiglu_apply.1} parent=23 // pred_fallthru
          _
      $region24: #{_swiglu_apply.1} parent=5 // pred_fallthru
        _
      %p157 = scmp.le.s32.totalorder 1, %s11
      %p158 = scmp.lt.s32.totalorder %s11, 3
      %p159 = pnand %p157, %p158
      %p160 = pneg %p159
      // Predicated region
      $region29: #{_swiglu_apply.1} parent=5 // pred_check
        _
      $region30: #{_swiglu_apply.1} parent=5 // pred_check_branch
        %162 = sbr.rel (%p159) target = $region32
      $region31: #{_swiglu_apply.1} parent=5 // pred_region
        %s163 = ssub.s32 %s11, 1
        // Predicated region
        $region33: #{_swiglu_apply.1} parent=31 // pred_check
          %p164 = pneg %p58
        $region34: #{_swiglu_apply.1} parent=31 // pred_check_branch
          %166 = sbr.rel (%p164) target = $region36
        $region35: #{_swiglu_apply.1} parent=31 // pred_region
          %167 = dma.done [#allocation3], 4096
        $region36: #{_swiglu_apply.1} parent=31 // pred_fallthru
          _
        // Predicated region
        $region37: #{_swiglu_apply.1} parent=31 // pred_check
          %p168 = pneg %p79
        $region38: #{_swiglu_apply.1} parent=31 // pred_check_branch
          %170 = sbr.rel (%p168) target = $region40
        $region39: #{_swiglu_apply.1} parent=31 // pred_region
          %171 = dma.done [#allocation5], 2048
        $region40: #{_swiglu_apply.1} parent=31 // pred_fallthru
          _
        %p172 = scmp.lt.s32.totalorder %s16, 1
        %s173 = scalar_select %p172, %s16, 1
        %s174 = smul.addr %s173, 8
        %s175 = scalar_lea.vmem %s0, %s174
        %p176 = pneg %p37
        %p177 = pneg %p34
        %p178 = pneg %p58
        %p179 = pneg %p55
        %p180 = pneg %p79
        %p181 = pneg %p76
        %p182 = pneg %p105
        %p183 = pneg %p102
        %p184 = scmp.lt.s32.totalorder %s16, 1
        %s185 = scalar_select %p184, %s16, 1
        %s186 = smul.addr %s185, 8
        %s187 = scalar_lea.vmem %s3, %s186
        %p188 = scmp.lt.s32.totalorder %s16, 1
        %s189 = scalar_select %p188, %s16, 1
        %s190 = smul.addr %s189, 8
        %s191 = scalar_lea.vmem %s0, %s190
        %p192 = scmp.lt.s32.totalorder %s16, 1
        %s193 = scalar_select %p192, %s16, 1
        %s194 = smul.addr %s193, 8
        %s195 = scalar_lea.vmem %s3, %s194
        %v196 = vld [vmem:[%s191] sm:$0xff]
        %v197 = vld [vmem:[#allocation2] sm:$0xff]
        %v198 = vld [vmem:[#allocation2 + $0x8] sm:$0xff]
        %v199 = vld [vmem:[#allocation2 + $0x10] sm:$0xff]
        %v200 = vld [vmem:[#allocation2 + $0x18] sm:$0xff]
        %v201 = vld [vmem:[#allocation2 + $0x20] sm:$0xff]
        %v202 = vld [vmem:[#allocation2 + $0x28] sm:$0xff]
        %v203 = vld [vmem:[#allocation2 + $0x30] sm:$0xff]
        %v204 = vld [vmem:[#allocation2 + $0x38] sm:$0xff]
        %v205 = vld [vmem:[#allocation2 + $0x40] sm:$0xff]
        %v206 = vld [vmem:[#allocation2 + $0x48] sm:$0xff]
        %v207 = vld [vmem:[#allocation2 + $0x50] sm:$0xff]
        %v208 = vld [vmem:[#allocation2 + $0x58] sm:$0xff]
        %v209 = vld [vmem:[#allocation2 + $0x60] sm:$0xff]
        %v210 = vld [vmem:[#allocation2 + $0x68] sm:$0xff]
        %v211 = vld [vmem:[#allocation2 + $0x70] sm:$0xff]
        %v212 = vld [vmem:[#allocation2 + $0x78] sm:$0xff]
        %v213 = vld [vmem:[#allocation2 + $0x80] sm:$0xff]
        %v214 = vld [vmem:[#allocation2 + $0x88] sm:$0xff]
        %v215 = vld [vmem:[#allocation2 + $0x90] sm:$0xff]
        %v216 = vld [vmem:[#allocation2 + $0x98] sm:$0xff]
        %v217 = vld [vmem:[#allocation2 + $0xa0] sm:$0xff]
        %v218 = vld [vmem:[#allocation2 + $0xa8] sm:$0xff]
        %v219 = vld [vmem:[#allocation2 + $0xb0] sm:$0xff]
        %v220 = vld [vmem:[#allocation2 + $0xb8] sm:$0xff]
        %v221 = vld [vmem:[#allocation2 + $0xc0] sm:$0xff]
        %v222 = vld [vmem:[#allocation2 + $0xc8] sm:$0xff]
        %v223 = vld [vmem:[#allocation2 + $0xd0] sm:$0xff]
        %v224 = vld [vmem:[#allocation2 + $0xd8] sm:$0xff]
        %v225 = vld [vmem:[#allocation2 + $0xe0] sm:$0xff]
        %v226 = vld [vmem:[#allocation2 + $0xe8] sm:$0xff]
        %v227 = vld [vmem:[#allocation2 + $0xf0] sm:$0xff]
        %v228 = vld [vmem:[#allocation2 + $0xf8] sm:$0xff]
        %229 = vmatprep.subr.mxu0 %v228
        %230 = vmatpush1.msra.mxu0 %v227
        %231 = vmatprep.subr.mxu0 %v226
        %232 = vmatpush1.msra.mxu0 %v225
        %233 = vmatprep.subr.mxu0 %v224
        %234 = vmatpush1.msra.mxu0 %v223
        %235 = vmatprep.subr.mxu0 %v222
        %236 = vmatpush1.msra.mxu0 %v221
        %237 = vmatprep.subr.mxu0 %v220
        %238 = vmatpush1.msra.mxu0 %v219
        %239 = vmatprep.subr.mxu0 %v218
        %240 = vmatpush1.msra.mxu0 %v217
        %241 = vmatprep.subr.mxu0 %v216
        %242 = vmatpush1.msra.mxu0 %v215
        %243 = vmatprep.subr.mxu0 %v214
        %244 = vmatpush1.msra.mxu0 %v213
        %245 = vmatprep.subr.mxu0 %v212
        %246 = vmatpush1.msra.mxu0 %v211
        %247 = vmatprep.subr.mxu0 %v210
        %248 = vmatpush1.msra.mxu0 %v209
        %249 = vmatprep.subr.mxu0 %v208
        %250 = vmatpush1.msra.mxu0 %v207
        %251 = vmatprep.subr.mxu0 %v206
        %252 = vmatpush1.msra.mxu0 %v205
        %253 = vmatprep.subr.mxu0 %v204
        %254 = vmatpush1.msra.mxu0 %v203
        %255 = vmatprep.subr.mxu0 %v202
        %256 = vmatpush1.msra.mxu0 %v201
        %257 = vmatprep.subr.mxu0 %v200
        %258 = vmatpush1.msra.mxu0 %v199
        %259 = vmatprep.subr.mxu0 %v198
        %260 = vmatpush1.msra.mxu0 %v197
        %261 = vmatprep.subr.mxu0 0.0
        %262 = vmatpush2.msra.mxu0 0.0
        %263 = vmatprep.subr.mxu0 0.0
        %264 = vmatpush2.msra.mxu0 0.0
        %265 = vmatprep.subr.mxu0 0.0
        %266 = vmatpush2.msra.mxu0 0.0
        %267 = vmatprep.subr.mxu0 0.0
        %268 = vmatpush2.msra.mxu0 0.0
        %269 = vmatprep.subr.mxu0 0.0
        %270 = vmatpush2.msra.mxu0 0.0
        %271 = vmatprep.subr.mxu0 0.0
        %272 = vmatpush2.msra.mxu0 0.0
        %273 = vmatprep.subr.mxu0 0.0
        %274 = vmatpush2.msra.mxu0 0.0
        %275 = vmatprep.subr.mxu0 0.0
        %276 = vmatpush2.msra.mxu0 0.0
        %277 = vmatprep.subr.mxu0 0.0
        %278 = vmatpush2.msra.mxu0 0.0
        %279 = vmatprep.subr.mxu0 0.0
        %280 = vmatpush2.msra.mxu0 0.0
        %281 = vmatprep.subr.mxu0 0.0
        %282 = vmatpush2.msra.mxu0 0.0
        %283 = vmatprep.subr.mxu0 0.0
        %284 = vmatpush2.msra.mxu0 0.0
        %285 = vmatprep.subr.mxu0 0.0
        %286 = vmatpush2.msra.mxu0 0.0
        %287 = vmatprep.subr.mxu0 0.0
        %288 = vmatpush2.msra.mxu0 0.0
        %289 = vmatprep.subr.mxu0 0.0
        %290 = vmatpush2.msra.mxu0 0.0
        %291 = vmatprep.subr.mxu0 0.0
        %292 = vmatpush2.msra.mxu0 0.0
        %293 = vmatprep.mubr.f32.mxu0 0.0
        %294 = vmatmul.mubr.f32.gmra.mxu0 %v196
        %v295 = vpop.f32.mrf.mxu0
        %v296 = vadd.f32 0.0, %v295
        %v297 = vpop.f32.mrf.mxu0
        %v298 = vadd.f32 0.0, %v297
        %299 = vdwg.mxu0
        %v300 = vxor.u32 %v296, 2147483648
        %v301 = vmul.f32 %v300, 1.442695
        %v302 = vpow.pop %v301
        %v303 = vadd.f32 %v302, 1.0
        %v304 = vrcp.pop %v303
        %v305 = vmul.f32 1.0, %v304
        %v306 = vmul.f32 %v296, %v305
        %v307 = vmul.f32 %v306, %v298
        %v308 = vld [vmem:[#allocation4] sm:$0xff]
        %v309 = vld [vmem:[#allocation4 + $0x8] sm:$0xff]
        %v310 = vld [vmem:[#allocation4 + $0x10] sm:$0xff]
        %v311 = vld [vmem:[#allocation4 + $0x18] sm:$0xff]
        %v312 = vld [vmem:[#allocation4 + $0x20] sm:$0xff]
        %v313 = vld [vmem:[#allocation4 + $0x28] sm:$0xff]
        %v314 = vld [vmem:[#allocation4 + $0x30] sm:$0xff]
        %v315 = vld [vmem:[#allocation4 + $0x38] sm:$0xff]
        %v316 = vld [vmem:[#allocation4 + $0x40] sm:$0xff]
        %v317 = vld [vmem:[#allocation4 + $0x48] sm:$0xff]
        %v318 = vld [vmem:[#allocation4 + $0x50] sm:$0xff]
        %v319 = vld [vmem:[#allocation4 + $0x58] sm:$0xff]
        %v320 = vld [vmem:[#allocation4 + $0x60] sm:$0xff]
        %v321 = vld [vmem:[#allocation4 + $0x68] sm:$0xff]
        %v322 = vld [vmem:[#allocation4 + $0x70] sm:$0xff]
        %v323 = vld [vmem:[#allocation4 + $0x78] sm:$0xff]
        %324 = vmatprep.subr.mxu0 0.0
        %325 = vmatpush1.msra.mxu0 %v323
        %326 = vmatprep.subr.mxu0 0.0
        %327 = vmatpush1.msra.mxu0 %v322
        %328 = vmatprep.subr.mxu0 0.0
        %329 = vmatpush1.msra.mxu0 %v321
        %330 = vmatprep.subr.mxu0 0.0
        %331 = vmatpush1.msra.mxu0 %v320
        %332 = vmatprep.subr.mxu0 0.0
        %333 = vmatpush1.msra.mxu0 %v319
        %334 = vmatprep.subr.mxu0 0.0
        %335 = vmatpush1.msra.mxu0 %v318
        %336 = vmatprep.subr.mxu0 0.0
        %337 = vmatpush1.msra.mxu0 %v317
        %338 = vmatprep.subr.mxu0 0.0
        %339 = vmatpush1.msra.mxu0 %v316
        %340 = vmatprep.subr.mxu0 0.0
        %341 = vmatpush1.msra.mxu0 %v315
        %342 = vmatprep.subr.mxu0 0.0
        %343 = vmatpush1.msra.mxu0 %v314
        %344 = vmatprep.subr.mxu0 0.0
        %345 = vmatpush1.msra.mxu0 %v313
        %346 = vmatprep.subr.mxu0 0.0
        %347 = vmatpush1.msra.mxu0 %v312
        %348 = vmatprep.subr.mxu0 0.0
        %349 = vmatpush1.msra.mxu0 %v311
        %350 = vmatprep.subr.mxu0 0.0
        %351 = vmatpush1.msra.mxu0 %v310
        %352 = vmatprep.subr.mxu0 0.0
        %353 = vmatpush1.msra.mxu0 %v309
        %354 = vmatprep.subr.mxu0 0.0
        %355 = vmatpush1.msra.mxu0 %v308
        %356 = vmatprep.subr.mxu0 0.0
        %357 = vmatpush2.msra.mxu0 0.0
        %358 = vmatprep.subr.mxu0 0.0
        %359 = vmatpush2.msra.mxu0 0.0
        %360 = vmatprep.subr.mxu0 0.0
        %361 = vmatpush2.msra.mxu0 0.0
        %362 = vmatprep.subr.mxu0 0.0
        %363 = vmatpush2.msra.mxu0 0.0
        %364 = vmatprep.subr.mxu0 0.0
        %365 = vmatpush2.msra.mxu0 0.0
        %366 = vmatprep.subr.mxu0 0.0
        %367 = vmatpush2.msra.mxu0 0.0
        %368 = vmatprep.subr.mxu0 0.0
        %369 = vmatpush2.msra.mxu0 0.0
        %370 = vmatprep.subr.mxu0 0.0
        %371 = vmatpush2.msra.mxu0 0.0
        %372 = vmatprep.subr.mxu0 0.0
        %373 = vmatpush2.msra.mxu0 0.0
        %374 = vmatprep.subr.mxu0 0.0
        %375 = vmatpush2.msra.mxu0 0.0
        %376 = vmatprep.subr.mxu0 0.0
        %377 = vmatpush2.msra.mxu0 0.0
        %378 = vmatprep.subr.mxu0 0.0
        %379 = vmatpush2.msra.mxu0 0.0
        %380 = vmatprep.subr.mxu0 0.0
        %381 = vmatpush2.msra.mxu0 0.0
        %382 = vmatprep.subr.mxu0 0.0
        %383 = vmatpush2.msra.mxu0 0.0
        %384 = vmatprep.subr.mxu0 0.0
        %385 = vmatpush2.msra.mxu0 0.0
        %386 = vmatprep.subr.mxu0 0.0
        %387 = vmatpush2.msra.mxu0 0.0
        %388 = vmatprep.mubr.f32.mxu0 0.0
        %389 = vmatmul.mubr.f32.gmra.mxu0 %v307
        %v390 = vpop.f32.mrf.mxu0
        %v391 = vadd.f32 0.0, %v390
        %v392 = vpop.f32.mrf.mxu0
        %393 = vdwg.mxu0
        %394 = vst [vmem:[%s195] sm:$0xff] %v391
        %p395 = scmp.lt.s32.totalorder %s16, 1
        %s396 = scalar_select %p395, %s16, 1
        %s397 = smul.addr %s396, 8
        %s398 = scalar_lea.vmem %s3, %s397
        // Predicated region
        $region41: #{_swiglu_apply.1} parent=31 // pred_check
          %p399 = pneg %p102
        $region42: #{_swiglu_apply.1} parent=31 // pred_check_branch
          %401 = sbr.rel (%p399) target = $region44
        $region43: #{_swiglu_apply.1} parent=31 // pred_region
          _
        $region44: #{_swiglu_apply.1} parent=31 // pred_fallthru
          _
      $region32: #{_swiglu_apply.1} parent=5 // pred_fallthru
        _
      %p402 = scmp.le.s32.totalorder 2, %s11
      // Predicated region
      $region45: #{_swiglu_apply.1} parent=5 // pred_check
        %p403 = pneg %p402
      $region46: #{_swiglu_apply.1} parent=5 // pred_check_branch
        %405 = sbr.rel (%p403) target = $region48
      $region47: #{_swiglu_apply.1} parent=5 // pred_region
        %s406 = ssub.s32 %s11, 2
        // Predicated region
        $region49: #{_swiglu_apply.1} parent=47 // pred_check
          %p407 = pneg %p108
        $region50: #{_swiglu_apply.1} parent=47 // pred_check_branch
          %409 = sbr.rel (%p407) target = $region52
        $region51: #{_swiglu_apply.1} parent=47 // pred_region
          %p410 = scmp.lt.s32.totalorder %s17, 1
          %s411 = scalar_select %p410, %s17, 1
          %s412 = smul.addr %s411, 8
          %s413 = scalar_lea.vmem %s3, %s412
        $region52: #{_swiglu_apply.1} parent=47 // pred_fallthru
          _
      $region48: #{_swiglu_apply.1} parent=5 // pred_fallthru
        _
    $region6: #{_swiglu_apply.1} parent=1 // loop_footer
      %s15 = sadd.s32 1, %s11
    $region7: #{_swiglu_apply.1} parent=1 // loop_footer_branch
      %10 = sbr.rel target = $region3
    $region8: #{_swiglu_apply.1} parent=1 // loop_exit
      _
    %414 = vsyncpa [#allocation3], 1
    %s415 = scalar_lea.sflag [#allocation3], 1
    %416 = vsyncpa %s415, 1
    %417 = vsyncpa [#allocation5], 1

</llo_original>
